<compile_context>
chip_gen: v5e
topology: v5e:2x2
jax: 0.10.0
libtpu: 0.0.40
codegen_flags: <defaults>
</compile_context>

<pallas_src>
import functools

import jax
import jax.numpy as jnp
from jax.experimental import pallas as pl
from jax.experimental.pallas import tpu as pltpu


_NEG_SLOPE = 0.2

_COMPILER_PARAMS = pltpu.CompilerParams(
    dimension_semantics=("parallel", "parallel"),   # (batch, L-tiles) -> both TCs on v7x
    vmem_limit_bytes=32 * 1024 * 1024,              # usage is KBs; safe on v5e/v6e/v7x
)

_CONTRACT = (((1,), (0,)), ((), ()))                # (A, K) x (K, B) -> (A, B)


# ---------------------------------------------------------------------------
# In-kernel helpers (traced inside the Pallas kernels)
# ---------------------------------------------------------------------------

def _conv_taps(u, halo, seg):
    """im2col taps for Conv1d(k=3, pad=1) along the lane axis.

    u:    (Cin, W)  activation tile (channels on sublanes, positions on lanes)
    halo: (Cin, 2)  col 0 = sample left of the tile, col 1 = sample right of it
    seg:  static period of independent sequences inside the tile (== W for a plain
          L-tile; == 2*L when several batch elements are folded into the lane axis)

    Returns (3*Cin, W): rows ordered [u, u[l-1], u[l+1]] matching _prep_conv_weights.
    """
    cin, width = u.shape
    lane = jax.lax.broadcasted_iota(jnp.int32, (cin, width), 1)
    if seg == width:
        pos = lane
    else:
        pos = jnp.bitwise_and(lane, seg - 1)        # seg is a power of two (folded path)
    lcol = halo[:, 0:1]
    rcol = halo[:, 1:2]
    # Lane rolls use the XLU slot; boundary lanes are patched from the halo column
    # (zero at sequence edges -> exactly the conv's zero padding).
    u_prev = jnp.where(pos == 0, lcol, pltpu.roll(u, shift=1, axis=1))
    u_next = jnp.where(pos == seg - 1, rcol, pltpu.roll(u, shift=width - 1, axis=1))
    return jnp.concatenate([u, u_prev, u_next], axis=0)


def _leaky_relu(h):
    return jnp.where(h >= 0.0, h, _NEG_SLOPE * h)


# ---------------------------------------------------------------------------
# Pallas kernels (one fused call per block)
# ---------------------------------------------------------------------------

def _block_kernel(u_ref, halo_ref, w_ref, b_ref, o_ref, *, seg):
    """Non-last block: Conv1d(k=3,p=1) on the x2-upsampled input + bias + LeakyReLU."""
    u = u_ref[0].astype(jnp.float32)                        # (Cin, T)
    halo = halo_ref[0, 0].astype(jnp.float32)               # (Cin, 2)
    x_cat = _conv_taps(u, halo, seg)                        # (3Cin, T)
    h = jax.lax.dot_general(w_ref[...], x_cat, _CONTRACT,
                            preferred_element_type=jnp.float32)
    h = h + b_ref[...]
    o_ref[0] = _leaky_relu(h).astype(o_ref.dtype)


def _last_block_kernel(*refs, seg, fade):
    """Last block: intermediate stage + 1x1 out-conv (+ previous block's fade tap
    + alpha mix), all fused into one kernel."""
    if fade:
        (u_ref, halo_ref, w_ref, b_ref, wout_ref, bout_ref,
         wprev_ref, bprev_ref, alpha_ref, o_ref) = refs
    else:
        (u_ref, halo_ref, w_ref, b_ref, wout_ref, bout_ref, o_ref) = refs

    u = u_ref[0].astype(jnp.float32)
    halo = halo_ref[0, 0].astype(jnp.float32)
    x_cat = _conv_taps(u, halo, seg)
    h = jax.lax.dot_general(w_ref[...], x_cat, _CONTRACT,
                            preferred_element_type=jnp.float32)
    h = _leaky_relu(h + b_ref[...])
    out = jax.lax.dot_general(wout_ref[...], h, _CONTRACT,
                              preferred_element_type=jnp.float32) + bout_ref[...]
    if fade:
        # tmp = prev_block.out_sequence(x) then nearest x2 upsample; the 1x1 out-conv
        # commutes with nearest upsampling, so apply it to the upsampled u directly.
        a = alpha_ref[0, 0]                                  # traced SMEM scalar
        tmp = jax.lax.dot_general(wprev_ref[...], u, _CONTRACT,
                                  preferred_element_type=jnp.float32) + bprev_ref[...]
        out = jnp.where(a < 1.0, a * out + (1.0 - a) * tmp, out)
    o_ref[0] = out.astype(o_ref.dtype)


# ---------------------------------------------------------------------------
# Host-side preparation (tiny, done once per call)
# ---------------------------------------------------------------------------

def _prep_conv_weights(params):
    """[w1 | w0 | w2] (Ch, 3*Cin) matching _conv_taps' [u, u_prev, u_next] rows."""
    w = params["conv_w"].astype(jnp.float32)      # (Ch, Cin, 3), PyTorch OIK layout
    b = params["conv_b"].astype(jnp.float32)      # (Ch,)
    w_cat = jnp.concatenate([w[:, :, 1], w[:, :, 0], w[:, :, 2]], axis=1)
    return w_cat, b[:, None]


def _choose_tile(total):
    """Lane tile over the upsampled length axis (multiple of 128, 512-1024 sweet spot)."""
    if total <= 1024:
        return total
    for t in (1024, 512, 256, 128):
        if total % t == 0:
            return t
    return total


def _prepare_length_tiling(u):
    """Fold tiny-L batches into lanes (lane-dense stores), or tile long L with a
    one-sample halo column per tile boundary.  Returns
    (u_k, halo, (nb, nt), seg, tile, fold, (n, m))."""
    n, c, m = u.shape
    fold = (m < 128) and (n > 1) and (n * m <= 2048) and ((m & (m - 1)) == 0)
    if fold:
        # (N, C, m) -> (1, C, N*m): one lane-dense block; conv taps are masked at
        # batch boundaries inside the kernel (seg = m), so nothing leaks across.
        u_k = jnp.transpose(u, (1, 0, 2)).reshape(1, c, n * m)
        nb, seg, tile = 1, m, n * m
    else:
        u_k = u
        nb = n
        tile = _choose_tile(m)
        seg = tile
    total = u_k.shape[2]
    nt = total // tile
    if nt > 1:
        # Halo columns: left/right neighbour sample of every tile (zero at the edges).
        ends = u_k[:, :, tile - 1::tile]                     # (nb, c, nt)
        starts = u_k[:, :, 0::tile]                          # (nb, c, nt)
        zcol = jnp.zeros((nb, c, 1), u_k.dtype)
        left = jnp.concatenate([zcol, ends[:, :, :-1]], axis=2)
        right = jnp.concatenate([starts[:, :, 1:], zcol], axis=2)
        halo = jnp.transpose(jnp.stack([left, right], axis=-1), (0, 2, 1, 3))
    else:
        halo = jnp.zeros((nb, 1, c, 2), u_k.dtype)
    return u_k, halo, (nb, nt), seg, tile, fold, (n, m)


# ---------------------------------------------------------------------------
# pallas_call wrappers (one fused call per block)
# ---------------------------------------------------------------------------

def run_block(x, params):
    """Non-last block: nearest-x2 upsample -> Conv1d(k=3,p=1) -> LeakyReLU.
    (N, Cin, L) -> (N, Ch, 2L)."""
    w_cat, b = _prep_conv_weights(params)
    ch = b.shape[0]
    # TODO(synk): move the x2 upsample into the kernel (lane-interleave store) once
    # Mosaic supports stride-2 lane stores; this repeat costs one extra HBM round trip.
    u = jnp.repeat(x, 2, axis=2)
    u_k, halo, (nb, nt), seg, tile, fold, (n, m) = _prepare_length_tiling(u)
    cin, total = u_k.shape[1], u_k.shape[2]
    out = pl.pallas_call(
        functools.partial(_block_kernel, seg=seg),
        out_shape=jax.ShapeDtypeStruct((nb, ch, total), x.dtype),
        grid=(nb, nt),
        in_specs=[
            pl.BlockSpec((1, cin, tile), lambda i, j: (i, 0, j)),
            pl.BlockSpec((1, 1, cin, 2), lambda i, j: (i, j, 0, 0)),
            pl.BlockSpec((ch, 3 * cin), lambda i, j: (0, 0)),        # resident weights
            pl.BlockSpec((ch, 1), lambda i, j: (0, 0)),
        ],
        out_specs=pl.BlockSpec((1, ch, tile), lambda i, j: (i, 0, j)),
        compiler_params=_COMPILER_PARAMS,
    )(u_k, halo, w_cat, b)
    if fold:
        out = out.reshape(ch, n, m).transpose(1, 0, 2)
    return out


def run_last_block(x, params, prev_params=None, alpha=1.0):
    """Last block: intermediate stage + 1x1 out-conv (+ fused fade tap & alpha mix).
    (N, Cin, L) -> (N, Csig, 2L)."""
    w_cat, b = _prep_conv_weights(params)
    ch = b.shape[0]
    w_out = params["out_w"][:, :, 0].astype(jnp.float32)     # (Csig, Ch)
    b_out = params["out_b"].astype(jnp.float32)[:, None]     # (Csig, 1)
    csig = w_out.shape[0]
    fade = prev_params is not None

    u = jnp.repeat(x, 2, axis=2)
    u_k, halo, (nb, nt), seg, tile, fold, (n, m) = _prepare_length_tiling(u)
    cin, total = u_k.shape[1], u_k.shape[2]

    in_specs = [
        pl.BlockSpec((1, cin, tile), lambda i, j: (i, 0, j)),
        pl.BlockSpec((1, 1, cin, 2), lambda i, j: (i, j, 0, 0)),
        pl.BlockSpec((ch, 3 * cin), lambda i, j: (0, 0)),
        pl.BlockSpec((ch, 1), lambda i, j: (0, 0)),
        pl.BlockSpec((csig, ch), lambda i, j: (0, 0)),
        pl.BlockSpec((csig, 1), lambda i, j: (0, 0)),
    ]
    args = [u_k, halo, w_cat, b, w_out, b_out]
    if fade:
        w_prev = prev_params["out_w"][:, :, 0].astype(jnp.float32)   # (Csig, Cin)
        b_prev = prev_params["out_b"].astype(jnp.float32)[:, None]
        alpha_arr = jnp.asarray(alpha, jnp.float32).reshape(1, 1)
        in_specs += [
            pl.BlockSpec((csig, cin), lambda i, j: (0, 0)),
            pl.BlockSpec((csig, 1), lambda i, j: (0, 0)),
            pl.BlockSpec(memory_space=pltpu.MemorySpace.SMEM),       # traced scalar
        ]
        args += [w_prev, b_prev, alpha_arr]

    out = pl.pallas_call(
        functools.partial(_last_block_kernel, seg=seg, fade=fade),
        out_shape=jax.ShapeDtypeStruct((nb, csig, total), x.dtype),
        grid=(nb, nt),
        in_specs=in_specs,
        out_specs=pl.BlockSpec((1, csig, tile), lambda i, j: (i, 0, j)),
        compiler_params=_COMPILER_PARAMS,
    )(*args)
    if fold:
        out = out.reshape(csig, n, m).transpose(1, 0, 2)
    return out


# ---------------------------------------------------------------------------
# ProgressiveGenerator.forward equivalent (NCL in / NCL out)
# ---------------------------------------------------------------------------

def progressive_generator_forward(blocks, x_ncl, cur_block, alpha):
    """cur_block is static (changes only between progression stages); alpha is a
    traced scalar, so per-step fade updates do NOT recompile.  The fade path is gated
    structurally on cur_block >= 1; the kernel's `alpha < 1` select matches the
    PyTorch semantics exactly for alpha >= 1."""
    x = x_ncl
    for i in range(cur_block + 1):
        if i != cur_block:
            x = run_block(x, blocks[i])
        else:
            prev = blocks[i - 1] if i >= 1 else None
            x = run_last_block(x, blocks[i], prev_params=prev, alpha=alpha)
    return x


# ---------------------------------------------------------------------------
# Deterministic parameter init (standard eeggan generator block shapes)
# ---------------------------------------------------------------------------

def init_block(key, c_in, c_hidden, c_out, k=3):
    k0, k1, k2, k3 = jax.random.split(key, 4)
    he = lambda fan_in: (2.0 / fan_in) ** 0.5
    return {
        "conv_w": jax.random.normal(k0, (c_hidden, c_in, k), jnp.float32) * he(k * c_in),
        "conv_b": jax.random.normal(k1, (c_hidden,), jnp.float32) * 0.1,
        "out_w": jax.random.normal(k2, (c_out, c_hidden, 1), jnp.float32) * he(c_hidden),
        "out_b": jax.random.normal(k3, (c_out,), jnp.float32) * 0.1,
    }


# ---------------------------------------------------------------------------
# Pure-JAX reference (independent conv path) for verification
# ---------------------------------------------------------------------------

def _ref_conv1d_ncl(x, w, b, padding, negative_slope=None):
    y = jax.lax.conv_general_dilated(
        x, w, window_strides=(1,), padding=[(padding, padding)],
        dimension_numbers=("NCH", "OIH", "NCH"))
    y = y + b[None, :, None]
    if negative_slope is not None:
        y = jnp.where(y >= 0, y, negative_slope * y)
    return y


def _ref_forward(blocks, x, cur_block, alpha):
    up = lambda z: jnp.repeat(z, 2, axis=2)
    fade = False
    tmp = None
    for i in range(cur_block + 1):
        p = blocks[i]
        x = _ref_conv1d_ncl(up(x), p["conv_w"], p["conv_b"], 1, _NEG_SLOPE)
        if i == cur_block:
            x = _ref_conv1d_ncl(x, p["out_w"], p["out_b"], 0)
        elif alpha < 1.0 and i == cur_block - 1:
            tmp = _ref_conv1d_ncl(x, p["out_w"], p["out_b"], 0)
            fade = True
    if fade:
        x = alpha * x + (1.0 - alpha) * up(tmp)
    return x


# ---------------------------------------------------------------------------
# main
# ---------------------------------------------------------------------------

if __name__ == "__main__":
    key = jax.random.PRNGKey(0)
    k_in, k_in2, k_b0, k_b1 = jax.random.split(key, 4)

    batch, c_in, c_hidden, c_sig, length = 2, 8, 8, 2, 16
    x = jax.random.normal(k_in, (batch, c_in, length), jnp.float32)       # NCL

    blocks = [
        init_block(k_b0, c_in, c_hidden, c_sig),
        init_block(k_b1, c_hidden, c_hidden, c_sig),
    ]

    fwd = jax.jit(progressive_generator_forward, static_argnums=(2,))     # alpha traced

    # Case 1: two blocks, mid-fade (out-conv + fade tap + alpha mix, batch-folded lanes).
    out = jax.block_until_ready(fwd(blocks, x, 1, 0.5))
    ref = _ref_forward(blocks, x, 1, 0.5)
    assert out.shape == ref.shape == (batch, c_sig, length * 4), out.shape
    assert jnp.allclose(out, ref, atol=1e-4, rtol=1e-4), float(jnp.abs(out - ref).max())

    # Changing alpha must not change structure (traced scalar) and must match torch's
    # "no fade when alpha == 1" semantics.
    out_b = jax.block_until_ready(fwd(blocks, x, 1, 1.0))
    ref_b = _ref_forward(blocks, x, 1, 1.0)
    assert jnp.allclose(out_b, ref_b, atol=1e-4, rtol=1e-4), float(jnp.abs(out_b - ref_b).max())

    # Case 2: single block, no fade.
    out0 = jax.block_until_ready(fwd(blocks, x, 0, 1.0))
    ref0 = _ref_forward(blocks, x, 0, 1.0)
    assert jnp.allclose(out0, ref0, atol=1e-4, rtol=1e-4), float(jnp.abs(out0 - ref0).max())

    # Case 3: longer sequence -> exercises the L-tile grid axis (nt > 1) + halo columns.
    x2 = jax.random.normal(k_in2, (batch, c_in, 512), jnp.float32)
    out2 = jax.block_until_ready(fwd(blocks, x2, 1, 0.7))
    ref2 = _ref_forward(blocks, x2, 1, 0.7)
    assert out2.shape == (batch, c_sig, 2048), out2.shape
    assert jnp.allclose(out2, ref2, atol=1e-4, rtol=1e-4), float(jnp.abs(out2 - ref2).max())

    print("KERNEL_OK")
</pallas_src>

<mosaic_0001>
module attributes {stable_mosaic.version = 11 : i64} {
  func.func @_last_block_kernel(%arg0: i32, %arg1: i32, %arg2: memref<1x8x128xf32, #tpu.memory_space<vmem>>, %arg3: memref<1x1x8x2xf32, #tpu.memory_space<vmem>>, %arg4: memref<8x24xf32, #tpu.memory_space<vmem>>, %arg5: memref<8x1xf32, #tpu.memory_space<vmem>>, %arg6: memref<2x8xf32, #tpu.memory_space<vmem>>, %arg7: memref<2x1xf32, #tpu.memory_space<vmem>>, %arg8: memref<2x8xf32, #tpu.memory_space<vmem>>, %arg9: memref<2x1xf32, #tpu.memory_space<vmem>>, %arg10: memref<1x1xf32, #tpu.memory_space<smem>>, %arg11: memref<1x2x128xf32, #tpu.memory_space<vmem>>) attributes {dimension_semantics = [#tpu.dimension_semantics<parallel>, #tpu.dimension_semantics<parallel>], iteration_bounds = array<i64: 1, 1>, scalar_prefetch = 0 : i64, scratch_operands = 0 : i64, tpu.core_type = #tpu.core_type<tc>, window_params = [{transform_indices = @transform_0, window_bounds = array<i64: 1, 8, 128>}, {transform_indices = @transform_1, window_bounds = array<i64: 1, 1, 8, 2>}, {pipeline_mode = #tpu.pipeline_mode<synchronous>, transform_indices = @transform_2, window_bounds = array<i64: 8, 24>}, {pipeline_mode = #tpu.pipeline_mode<synchronous>, transform_indices = @transform_3, window_bounds = array<i64: 8, 1>}, {pipeline_mode = #tpu.pipeline_mode<synchronous>, transform_indices = @transform_4, window_bounds = array<i64: 2, 8>}, {pipeline_mode = #tpu.pipeline_mode<synchronous>, transform_indices = @transform_5, window_bounds = array<i64: 2, 1>}, {pipeline_mode = #tpu.pipeline_mode<synchronous>, transform_indices = @transform_6, window_bounds = array<i64: 2, 8>}, {pipeline_mode = #tpu.pipeline_mode<synchronous>, transform_indices = @transform_7, window_bounds = array<i64: 2, 1>}, {transform_indices = @transform_8, window_bounds = array<i64: 1, 1>}, {transform_indices = @transform_9, window_bounds = array<i64: 1, 2, 128>}]} {
    %c0 = arith.constant 0 : index
    %c0_0 = arith.constant 0 : index
    %c0_1 = arith.constant 0 : index
    %0 = vector.load %arg2[%c0, %c0_0, %c0_1] : memref<1x8x128xf32, #tpu.memory_space<vmem>>, vector<1x8x128xf32>
    %1 = vector.shape_cast %0 : vector<1x8x128xf32> to vector<8x128xf32>
    %c0_2 = arith.constant 0 : index
    %c0_3 = arith.constant 0 : index
    %c0_4 = arith.constant 0 : index
    %c0_5 = arith.constant 0 : index
    %2 = vector.load %arg3[%c0_2, %c0_3, %c0_4, %c0_5] : memref<1x1x8x2xf32, #tpu.memory_space<vmem>>, vector<1x1x8x2xf32>
    %3 = vector.shape_cast %2 : vector<1x1x8x2xf32> to vector<8x2xf32>
    %4 = tpu.iota {dimensions = array<i32: 1>} : vector<8x128xi32>
    %c63_i32 = arith.constant 63 : i32
    %5 = vector.broadcast %c63_i32 : i32 to vector<8x128xi32>
    %6 = arith.andi %4, %5 : vector<8x128xi32>
    %7 = vector.extract_strided_slice %3 {offsets = [0, 0], sizes = [8, 1], strides = [1, 1]} : vector<8x2xf32> to vector<8x1xf32>
    %8 = vector.extract_strided_slice %3 {offsets = [0, 1], sizes = [8, 1], strides = [1, 1]} : vector<8x2xf32> to vector<8x1xf32>
    %c0_i32 = arith.constant 0 : i32
    %9 = vector.broadcast %c0_i32 : i32 to vector<8x128xi32>
    %10 = arith.cmpi eq, %6, %9 : vector<8x128xi32>
    %c1_i32 = arith.constant 1 : i32
    %11 = tpu.dynamic_rotate %1 by %c1_i32 dim 1 : vector<8x128xf32>, i32 -> vector<8x128xf32>
    %12 = vector.shape_cast %7 : vector<8x1xf32> to vector<8x1xf32>
    %13 = vector.broadcast %12 : vector<8x1xf32> to vector<8x128xf32>
    %14 = arith.select %10, %13, %11 : vector<8x128xi1>, vector<8x128xf32>
    %c63_i32_6 = arith.constant 63 : i32
    %15 = vector.broadcast %c63_i32_6 : i32 to vector<8x128xi32>
    %16 = arith.cmpi eq, %6, %15 : vector<8x128xi32>
    %c127_i32 = arith.constant 127 : i32
    %17 = tpu.dynamic_rotate %1 by %c127_i32 dim 1 : vector<8x128xf32>, i32 -> vector<8x128xf32>
    %18 = vector.shape_cast %8 : vector<8x1xf32> to vector<8x1xf32>
    %19 = vector.broadcast %18 : vector<8x1xf32> to vector<8x128xf32>
    %20 = arith.select %16, %19, %17 : vector<8x128xi1>, vector<8x128xf32>
    %21 = tpu.concatenate %1, %14, %20 in 0 : vector<8x128xf32>, vector<8x128xf32>, vector<8x128xf32> -> vector<24x128xf32>
    %c0_7 = arith.constant 0 : index
    %c0_8 = arith.constant 0 : index
    %22 = vector.load %arg4[%c0_7, %c0_8] : memref<8x24xf32, #tpu.memory_space<vmem>>, vector<8x24xf32>
    %cst = arith.constant dense<0.000000e+00> : vector<8x128xf32>
    %23 = tpu.matmul %22, %21, %cst {dimension_numbers = #tpu.dot_dimension_numbers<[1], [0], [0], [1], [0, 0, 1, 1], [], []>} : vector<8x24xf32>, vector<24x128xf32>, vector<8x128xf32> -> vector<8x128xf32>
    %c0_9 = arith.constant 0 : index
    %c0_10 = arith.constant 0 : index
    %24 = vector.load %arg5[%c0_9, %c0_10] : memref<8x1xf32, #tpu.memory_space<vmem>>, vector<8x1xf32>
    %25 = vector.broadcast %24 : vector<8x1xf32> to vector<8x128xf32>
    %26 = arith.addf %23, %25 : vector<8x128xf32>
    %cst_11 = arith.constant 0.000000e+00 : f32
    %27 = vector.broadcast %cst_11 : f32 to vector<8x128xf32>
    %28 = arith.cmpf oge, %26, %27 : vector<8x128xf32>
    %cst_12 = arith.constant 2.000000e-01 : f32
    %29 = vector.broadcast %cst_12 : f32 to vector<8x128xf32>
    %30 = arith.mulf %29, %26 : vector<8x128xf32>
    %31 = arith.select %28, %26, %30 : vector<8x128xi1>, vector<8x128xf32>
    %c0_13 = arith.constant 0 : index
    %c0_14 = arith.constant 0 : index
    %32 = vector.load %arg6[%c0_13, %c0_14] : memref<2x8xf32, #tpu.memory_space<vmem>>, vector<2x8xf32>
    %cst_15 = arith.constant dense<0.000000e+00> : vector<2x128xf32>
    %33 = tpu.matmul %32, %31, %cst_15 {dimension_numbers = #tpu.dot_dimension_numbers<[1], [0], [0], [1], [0, 0, 1, 1], [], []>} : vector<2x8xf32>, vector<8x128xf32>, vector<2x128xf32> -> vector<2x128xf32>
    %c0_16 = arith.constant 0 : index
    %c0_17 = arith.constant 0 : index
    %34 = vector.load %arg7[%c0_16, %c0_17] : memref<2x1xf32, #tpu.memory_space<vmem>>, vector<2x1xf32>
    %35 = vector.broadcast %34 : vector<2x1xf32> to vector<2x128xf32>
    %36 = arith.addf %33, %35 : vector<2x128xf32>
    %c0_18 = arith.constant 0 : index
    %c0_19 = arith.constant 0 : index
    %37 = memref.load %arg10[%c0_18, %c0_19] : memref<1x1xf32, #tpu.memory_space<smem>>
    %c0_20 = arith.constant 0 : index
    %c0_21 = arith.constant 0 : index
    %38 = vector.load %arg8[%c0_20, %c0_21] : memref<2x8xf32, #tpu.memory_space<vmem>>, vector<2x8xf32>
    %cst_22 = arith.constant dense<0.000000e+00> : vector<2x128xf32>
    %39 = tpu.matmul %38, %1, %cst_22 {dimension_numbers = #tpu.dot_dimension_numbers<[1], [0], [0], [1], [0, 0, 1, 1], [], []>} : vector<2x8xf32>, vector<8x128xf32>, vector<2x128xf32> -> vector<2x128xf32>
    %c0_23 = arith.constant 0 : index
    %c0_24 = arith.constant 0 : index
    %40 = vector.load %arg9[%c0_23, %c0_24] : memref<2x1xf32, #tpu.memory_space<vmem>>, vector<2x1xf32>
    %41 = vector.broadcast %40 : vector<2x1xf32> to vector<2x128xf32>
    %42 = arith.addf %39, %41 : vector<2x128xf32>
    %cst_25 = arith.constant 1.000000e+00 : f32
    %43 = arith.cmpf olt, %37, %cst_25 : f32
    %44 = vector.broadcast %37 : f32 to vector<2x128xf32>
    %45 = arith.mulf %44, %36 : vector<2x128xf32>
    %cst_26 = arith.constant 1.000000e+00 : f32
    %46 = arith.subf %cst_26, %37 : f32
    %47 = vector.broadcast %46 : f32 to vector<2x128xf32>
    %48 = arith.mulf %47, %42 : vector<2x128xf32>
    %49 = arith.addf %45, %48 : vector<2x128xf32>
    %50 = arith.select %43, %49, %36 : vector<2x128xf32>
    %c0_27 = arith.constant 0 : index
    %c0_28 = arith.constant 0 : index
    %c0_29 = arith.constant 0 : index
    %51 = vector.load %arg11[%c0_27, %c0_28, %c0_29] : memref<1x2x128xf32, #tpu.memory_space<vmem>>, vector<1x2x128xf32>
    %52 = vector.shape_cast %51 : vector<1x2x128xf32> to vector<2x128xf32>
    %53 = vector.shape_cast %50 : vector<2x128xf32> to vector<1x2x128xf32>
    tpu.vector_store %arg11[%c0_27, %c0_28, %c0_29], %53 {strides = array<i32>} : memref<1x2x128xf32, #tpu.memory_space<vmem>>, vector<1x2x128xf32>,
    return
  }
  func.func @transform_0(%arg0: i32, %arg1: i32) -> (i32, i32, i32) {
    %c0_i32 = arith.constant 0 : i32
    %c0_i32_0 = arith.constant 0 : i32
    return %arg0, %c0_i32, %arg1 : i32, i32, i32
  }
  func.func @transform_1(%arg0: i32, %arg1: i32) -> (i32, i32, i32, i32) {
    %c0_i32 = arith.constant 0 : i32
    %c0_i32_0 = arith.constant 0 : i32
    %c0_i32_1 = arith.constant 0 : i32
    return %arg0, %arg1, %c0_i32, %c0_i32_0 : i32, i32, i32, i32
  }
  func.func @transform_2(%arg0: i32, %arg1: i32) -> (i32, i32) {
    %c0_i32 = arith.constant 0 : i32
    %c0_i32_0 = arith.constant 0 : i32
    %c0_i32_1 = arith.constant 0 : i32
    return %c0_i32, %c0_i32_0 : i32, i32
  }
  func.func @transform_3(%arg0: i32, %arg1: i32) -> (i32, i32) {
    %c0_i32 = arith.constant 0 : i32
    %c0_i32_0 = arith.constant 0 : i32
    %c0_i32_1 = arith.constant 0 : i32
    return %c0_i32, %c0_i32_0 : i32, i32
  }
  func.func @transform_4(%arg0: i32, %arg1: i32) -> (i32, i32) {
    %c0_i32 = arith.constant 0 : i32
    %c0_i32_0 = arith.constant 0 : i32
    %c0_i32_1 = arith.constant 0 : i32
    return %c0_i32, %c0_i32_0 : i32, i32
  }
  func.func @transform_5(%arg0: i32, %arg1: i32) -> (i32, i32) {
    %c0_i32 = arith.constant 0 : i32
    %c0_i32_0 = arith.constant 0 : i32
    %c0_i32_1 = arith.constant 0 : i32
    return %c0_i32, %c0_i32_0 : i32, i32
  }
  func.func @transform_6(%arg0: i32, %arg1: i32) -> (i32, i32) {
    %c0_i32 = arith.constant 0 : i32
    %c0_i32_0 = arith.constant 0 : i32
    %c0_i32_1 = arith.constant 0 : i32
    return %c0_i32, %c0_i32_0 : i32, i32
  }
  func.func @transform_7(%arg0: i32, %arg1: i32) -> (i32, i32) {
    %c0_i32 = arith.constant 0 : i32
    %c0_i32_0 = arith.constant 0 : i32
    %c0_i32_1 = arith.constant 0 : i32
    return %c0_i32, %c0_i32_0 : i32, i32
  }
  func.func @transform_8(%arg0: i32, %arg1: i32) -> (i32, i32) {
    %c0_i32 = arith.constant 0 : i32
    %c0_i32_0 = arith.constant 0 : i32
    %c0_i32_1 = arith.constant 0 : i32
    return %c0_i32, %c0_i32_0 : i32, i32
  }
  func.func @transform_9(%arg0: i32, %arg1: i32) -> (i32, i32, i32) {
    %c0_i32 = arith.constant 0 : i32
    %c0_i32_0 = arith.constant 0 : i32
    return %arg0, %c0_i32, %arg1 : i32, i32, i32
  }
}

module attributes {stable_mosaic.version = 11 : i64} {
  func.func @_block_kernel(%arg0: i32, %arg1: i32, %arg2: memref<1x8x64xf32, #tpu.memory_space<vmem>>, %arg3: memref<1x1x8x2xf32, #tpu.memory_space<vmem>>, %arg4: memref<8x24xf32, #tpu.memory_space<vmem>>, %arg5: memref<8x1xf32, #tpu.memory_space<vmem>>, %arg6: memref<1x8x64xf32, #tpu.memory_space<vmem>>) attributes {dimension_semantics = [#tpu.dimension_semantics<parallel>, #tpu.dimension_semantics<parallel>], iteration_bounds = array<i64: 1, 1>, scalar_prefetch = 0 : i64, scratch_operands = 0 : i64, tpu.core_type = #tpu.core_type<tc>, window_params = [{transform_indices = @transform_0, window_bounds = array<i64: 1, 8, 64>}, {transform_indices = @transform_1, window_bounds = array<i64: 1, 1, 8, 2>}, {pipeline_mode = #tpu.pipeline_mode<synchronous>, transform_indices = @transform_2, window_bounds = array<i64: 8, 24>}, {pipeline_mode = #tpu.pipeline_mode<synchronous>, transform_indices = @transform_3, window_bounds = array<i64: 8, 1>}, {transform_indices = @transform_4, window_bounds = array<i64: 1, 8, 64>}]} {
    %c0 = arith.constant 0 : index
    %c0_0 = arith.constant 0 : index
    %c0_1 = arith.constant 0 : index
    %0 = vector.load %arg2[%c0, %c0_0, %c0_1] : memref<1x8x64xf32, #tpu.memory_space<vmem>>, vector<1x8x64xf32>
    %1 = vector.shape_cast %0 : vector<1x8x64xf32> to vector<8x64xf32>
    %c0_2 = arith.constant 0 : index
    %c0_3 = arith.constant 0 : index
    %c0_4 = arith.constant 0 : index
    %c0_5 = arith.constant 0 : index
    %2 = vector.load %arg3[%c0_2, %c0_3, %c0_4, %c0_5] : memref<1x1x8x2xf32, #tpu.memory_space<vmem>>, vector<1x1x8x2xf32>
    %3 = vector.shape_cast %2 : vector<1x1x8x2xf32> to vector<8x2xf32>
    %4 = tpu.iota {dimensions = array<i32: 1>} : vector<8x64xi32>
    %c31_i32 = arith.constant 31 : i32
    %5 = vector.broadcast %c31_i32 : i32 to vector<8x64xi32>
    %6 = arith.andi %4, %5 : vector<8x64xi32>
    %7 = vector.extract_strided_slice %3 {offsets = [0, 0], sizes = [8, 1], strides = [1, 1]} : vector<8x2xf32> to vector<8x1xf32>
    %8 = vector.extract_strided_slice %3 {offsets = [0, 1], sizes = [8, 1], strides = [1, 1]} : vector<8x2xf32> to vector<8x1xf32>
    %c0_i32 = arith.constant 0 : i32
    %9 = vector.broadcast %c0_i32 : i32 to vector<8x64xi32>
    %10 = arith.cmpi eq, %6, %9 : vector<8x64xi32>
    %c1_i32 = arith.constant 1 : i32
    %11 = tpu.dynamic_rotate %1 by %c1_i32 dim 1 : vector<8x64xf32>, i32 -> vector<8x64xf32>
    %12 = vector.shape_cast %7 : vector<8x1xf32> to vector<8x1xf32>
    %13 = vector.broadcast %12 : vector<8x1xf32> to vector<8x64xf32>
    %14 = arith.select %10, %13, %11 : vector<8x64xi1>, vector<8x64xf32>
    %c31_i32_6 = arith.constant 31 : i32
    %15 = vector.broadcast %c31_i32_6 : i32 to vector<8x64xi32>
    %16 = arith.cmpi eq, %6, %15 : vector<8x64xi32>
    %c63_i32 = arith.constant 63 : i32
    %17 = tpu.dynamic_rotate %1 by %c63_i32 dim 1 : vector<8x64xf32>, i32 -> vector<8x64xf32>
    %18 = vector.shape_cast %8 : vector<8x1xf32> to vector<8x1xf32>
    %19 = vector.broadcast %18 : vector<8x1xf32> to vector<8x64xf32>
    %20 = arith.select %16, %19, %17 : vector<8x64xi1>, vector<8x64xf32>
    %21 = tpu.concatenate %1, %14, %20 in 0 : vector<8x64xf32>, vector<8x64xf32>, vector<8x64xf32> -> vector<24x64xf32>
    %c0_7 = arith.constant 0 : index
    %c0_8 = arith.constant 0 : index
    %22 = vector.load %arg4[%c0_7, %c0_8] : memref<8x24xf32, #tpu.memory_space<vmem>>, vector<8x24xf32>
    %cst = arith.constant dense<0.000000e+00> : vector<8x64xf32>
    %23 = tpu.matmul %22, %21, %cst {dimension_numbers = #tpu.dot_dimension_numbers<[1], [0], [0], [1], [0, 0, 1, 1], [], []>} : vector<8x24xf32>, vector<24x64xf32>, vector<8x64xf32> -> vector<8x64xf32>
    %c0_9 = arith.constant 0 : index
    %c0_10 = arith.constant 0 : index
    %24 = vector.load %arg5[%c0_9, %c0_10] : memref<8x1xf32, #tpu.memory_space<vmem>>, vector<8x1xf32>
    %25 = vector.broadcast %24 : vector<8x1xf32> to vector<8x64xf32>
    %26 = arith.addf %23, %25 : vector<8x64xf32>
    %cst_11 = arith.constant 0.000000e+00 : f32
    %27 = vector.broadcast %cst_11 : f32 to vector<8x64xf32>
    %28 = arith.cmpf oge, %26, %27 : vector<8x64xf32>
    %cst_12 = arith.constant 2.000000e-01 : f32
    %29 = vector.broadcast %cst_12 : f32 to vector<8x64xf32>
    %30 = arith.mulf %29, %26 : vector<8x64xf32>
    %31 = arith.select %28, %26, %30 : vector<8x64xi1>, vector<8x64xf32>
    %c0_13 = arith.constant 0 : index
    %c0_14 = arith.constant 0 : index
    %c0_15 = arith.constant 0 : index
    %32 = vector.load %arg6[%c0_13, %c0_14, %c0_15] : memref<1x8x64xf32, #tpu.memory_space<vmem>>, vector<1x8x64xf32>
    %33 = vector.shape_cast %32 : vector<1x8x64xf32> to vector<8x64xf32>
    %34 = vector.shape_cast %31 : vector<8x64xf32> to vector<1x8x64xf32>
    tpu.vector_store %arg6[%c0_13, %c0_14, %c0_15], %34 {strides = array<i32>} : memref<1x8x64xf32, #tpu.memory_space<vmem>>, vector<1x8x64xf32>,
    return
  }
  func.func @transform_0(%arg0: i32, %arg1: i32) -> (i32, i32, i32) {
    %c0_i32 = arith.constant 0 : i32
    %c0_i32_0 = arith.constant 0 : i32
    return %arg0, %c0_i32, %arg1 : i32, i32, i32
  }
  func.func @transform_1(%arg0: i32, %arg1: i32) -> (i32, i32, i32, i32) {
    %c0_i32 = arith.constant 0 : i32
    %c0_i32_0 = arith.constant 0 : i32
    %c0_i32_1 = arith.constant 0 : i32
    return %arg0, %arg1, %c0_i32, %c0_i32_0 : i32, i32, i32, i32
  }
  func.func @transform_2(%arg0: i32, %arg1: i32) -> (i32, i32) {
    %c0_i32 = arith.constant 0 : i32
    %c0_i32_0 = arith.constant 0 : i32
    %c0_i32_1 = arith.constant 0 : i32
    return %c0_i32, %c0_i32_0 : i32, i32
  }
  func.func @transform_3(%arg0: i32, %arg1: i32) -> (i32, i32) {
    %c0_i32 = arith.constant 0 : i32
    %c0_i32_0 = arith.constant 0 : i32
    %c0_i32_1 = arith.constant 0 : i32
    return %c0_i32, %c0_i32_0 : i32, i32
  }
  func.func @transform_4(%arg0: i32, %arg1: i32) -> (i32, i32, i32) {
    %c0_i32 = arith.constant 0 : i32
    %c0_i32_0 = arith.constant 0 : i32
    return %arg0, %c0_i32, %arg1 : i32, i32, i32
  }
}

</mosaic_0001>

<llo_original>
// kernel: progressive_generator_forward.3
$region0: #{progressive_generator_forward.3}
  #allocation0 [shape = 'u32[]', space=smem, size = 0x4, offset = 0x4, fixed_abs, tag = 'smem constant byte address 0x4 - core index']
  #allocation1 [shape = 'u32[72,128]{1,0:T(1,128)}', space=vmem, size = 0x9000, scoped, tag = 'internal scratch']
  #allocation2 [shape = 'f32[1,1]{1,0:T(1,128)S(6)}', space=smem, size = 0x200, scoped, tag = 'scoped memory for progressive_generator_forward.3']
  %s0 = inlined_call_operand.vmem [shape: f32[1,8,128], index: 0, kind: input, shape index: {}]
  %s1 = inlined_call_operand.vmem [shape: f32[1,1,8,2], index: 1, kind: input, shape index: {}]
  %s2 = inlined_call_operand.vmem [shape: f32[8,24], index: 2, kind: input, shape index: {}]
  %s3 = inlined_call_operand.vmem [shape: f32[8,1], index: 3, kind: input, shape index: {}]
  %s4 = inlined_call_operand.vmem [shape: f32[2,8], index: 4, kind: input, shape index: {}]
  %s5 = inlined_call_operand.vmem [shape: f32[2,1], index: 5, kind: input, shape index: {}]
  %s6 = inlined_call_operand.vmem [shape: f32[2,8], index: 6, kind: input, shape index: {}]
  %s7 = inlined_call_operand.vmem [shape: f32[2,1], index: 7, kind: input, shape index: {}]
  %s8 = inlined_call_operand.<no memory space> [shape: f32[1,1], index: 8, kind: input, shape index: {}]
  %s9 = inlined_call_operand.vmem [shape: f32[1,2,128], index: 9, kind: output, shape index: {}]
  %s10 = sld [smem:[#allocation0]]
  $region46: #{progressive_generator_forward.3} parent=0
    _
  %s12 = ssub.s32 1, %s10
  %s13 = scalar_select 0, %s12, %s10
  %14 = sst [smem:[#allocation2]] %s8
  // Predicated region
  $region2: #{progressive_generator_forward.3} parent=0 // pred_check
    _
  $region3: #{progressive_generator_forward.3} parent=0 // pred_check_branch
    %16 = sbr.rel (0) target = $region5
  $region4: #{progressive_generator_forward.3} parent=0 // pred_region
    _
  $region5: #{progressive_generator_forward.3} parent=0 // pred_fallthru
    _
  // Predicated region
  $region6: #{progressive_generator_forward.3} parent=0 // pred_check
    _
  $region7: #{progressive_generator_forward.3} parent=0 // pred_check_branch
    %18 = sbr.rel (0) target = $region9
  $region8: #{progressive_generator_forward.3} parent=0 // pred_region
    _
  $region9: #{progressive_generator_forward.3} parent=0 // pred_fallthru
    _
  // Predicated region
  $region10: #{progressive_generator_forward.3} parent=0 // pred_check
    _
  $region11: #{progressive_generator_forward.3} parent=0 // pred_check_branch
    %20 = sbr.rel (0) target = $region13
  $region12: #{progressive_generator_forward.3} parent=0 // pred_region
    _
  $region13: #{progressive_generator_forward.3} parent=0 // pred_fallthru
    _
  // Predicated region
  $region14: #{progressive_generator_forward.3} parent=0 // pred_check
    _
  $region15: #{progressive_generator_forward.3} parent=0 // pred_check_branch
    %22 = sbr.rel (0) target = $region17
  $region16: #{progressive_generator_forward.3} parent=0 // pred_region
    _
  $region17: #{progressive_generator_forward.3} parent=0 // pred_fallthru
    _
  // Predicated region
  $region18: #{progressive_generator_forward.3} parent=0 // pred_check
    _
  $region19: #{progressive_generator_forward.3} parent=0 // pred_check_branch
    %24 = sbr.rel (0) target = $region21
  $region20: #{progressive_generator_forward.3} parent=0 // pred_region
    _
  $region21: #{progressive_generator_forward.3} parent=0 // pred_fallthru
    _
  // Predicated region
  $region22: #{progressive_generator_forward.3} parent=0 // pred_check
    _
  $region23: #{progressive_generator_forward.3} parent=0 // pred_check_branch
    %26 = sbr.rel (0) target = $region25
  $region24: #{progressive_generator_forward.3} parent=0 // pred_region
    _
  $region25: #{progressive_generator_forward.3} parent=0 // pred_fallthru
    _
  // Predicated region
  $region26: #{progressive_generator_forward.3} parent=0 // pred_check
    _
  $region27: #{progressive_generator_forward.3} parent=0 // pred_check_branch
    %28 = sbr.rel (0) target = $region29
  $region28: #{progressive_generator_forward.3} parent=0 // pred_region
    _
  $region29: #{progressive_generator_forward.3} parent=0 // pred_fallthru
    _
  // Predicated region
  $region30: #{progressive_generator_forward.3} parent=0 // pred_check
    _
  $region31: #{progressive_generator_forward.3} parent=0 // pred_check_branch
    %30 = sbr.rel (0) target = $region33
  $region32: #{progressive_generator_forward.3} parent=0 // pred_region
    _
  $region33: #{progressive_generator_forward.3} parent=0 // pred_fallthru
    _
  // Predicated region
  $region34: #{progressive_generator_forward.3} parent=0 // pred_check
    _
  $region35: #{progressive_generator_forward.3} parent=0 // pred_check_branch
    %32 = sbr.rel (0) target = $region37
  $region36: #{progressive_generator_forward.3} parent=0 // pred_region
    _
  $region37: #{progressive_generator_forward.3} parent=0 // pred_fallthru
    _
  %v33 = vld [vmem:[%s0] sm:$0xff]
  %v34 = vld [vmem:[%s1] sm:$0xff]
  %v35 = vlaneseq
  %v36 = vand.u32 %v35, 127
  %v37 = vand.u32 %v36, 63
  %vm38 = vcmp.eq.s32.totalorder %v37, 0
  %39 = vrot.lane.b32.xlu0 %v33, 1
  %v40 = vpop.permute.xlu0 %39
  %42 = vset.pattern.permute.xlu0 0
  %43 = vperm.xlu0 %42, %v34
  %v44 = vpop.permute.xlu0 %43
  %v46 = vsel %vm38, %v44, %v40
  %vm47 = vcmp.eq.s32.totalorder %v37, 63
  %48 = vrot.lane.b32.xlu0 %v33, 127
  %v49 = vpop.permute.xlu0 %48
  %50 = vset.pattern.permute.xlu0 1
  %51 = vperm.xlu0 %50, %v34
  %v52 = vpop.permute.xlu0 %51
  %v54 = vsel %vm47, %v52, %v49
  %v55 = vld [vmem:[%s2] sm:$0xff]
  %v56 = vld [vmem:[%s3] sm:$0xff]
  %58 = vset.pattern.permute.xlu0 0
  %59 = vperm.xlu0 %58, %v56
  %v60 = vpop.permute.xlu0 %59
  %vm62 = vcmask 195584
  %v64 = vsel %vm62, %v55, 0
  %66 = vmatpush.msra.mxu0 0.0
  %67 = vmatpush.msra.mxu0 0.0
  %68 = vmatpush.msra.mxu0 0.0
  %69 = vmatpush.msra.mxu0 0.0
  %70 = vmatpush.msra.mxu0 0.0
  %71 = vmatpush.msra.mxu0 0.0
  %72 = vmatpush.msra.mxu0 0.0
  %73 = vmatpush.msra.mxu0 0.0
  %74 = vmatpush.msra.mxu0 0.0
  %75 = vmatpush.msra.mxu0 0.0
  %76 = vmatpush.msra.mxu0 0.0
  %77 = vmatpush.msra.mxu0 0.0
  %78 = vmatpush.msra.mxu0 0.0
  %79 = vmatpush.msra.mxu0 %v54
  %80 = vmatpush.msra.mxu0 %v46
  %81 = vmatpush.msra.mxu0 %v33
  %82 = vmatmul.f32.gmra.mxu0 %v64
  %v83 = vpop.f32.mrf.mxu0
  %v84 = vadd.f32 %v60, %v83
  %85 = vdwg.mxu0
  %vm86 = vcmp.ge.f32.partialorder %v84, 0.0
  %v87 = vmul.f32 %v84, 0.2
  %v88 = vsel %vm86, %v84, %v87
  %v89 = vld [vmem:[%s4] sm:$0x3]
  %v90 = vld [vmem:[%s5] sm:$0x3]
  %92 = vset.pattern.permute.xlu0 0
  %93 = vperm.xlu0 %92, %v90
  %v94 = vpop.permute.xlu0 %93
  %vm96 = vcmask 64512
  %v98 = vsel %vm96, %v89, 0
  %100 = vmatpush.msra.mxu0 0.0
  %101 = vmatpush.msra.mxu0 0.0
  %102 = vmatpush.msra.mxu0 0.0
  %103 = vmatpush.msra.mxu0 0.0
  %104 = vmatpush.msra.mxu0 0.0
  %105 = vmatpush.msra.mxu0 0.0
  %106 = vmatpush.msra.mxu0 0.0
  %107 = vmatpush.msra.mxu0 0.0
  %108 = vmatpush.msra.mxu0 0.0
  %109 = vmatpush.msra.mxu0 0.0
  %110 = vmatpush.msra.mxu0 0.0
  %111 = vmatpush.msra.mxu0 0.0
  %112 = vmatpush.msra.mxu0 0.0
  %113 = vmatpush.msra.mxu0 0.0
  %114 = vmatpush.msra.mxu0 0.0
  %115 = vmatpush.msra.mxu0 %v88
  %116 = vmatmul.f32.gmra.mxu0 %v98
  %v117 = vpop.f32.mrf.mxu0
  %v118 = vadd.f32 %v94, %v117
  %119 = vdwg.mxu0
  %s120 = sld [smem:[#allocation2]]
  %v121 = vld [vmem:[%s6] sm:$0x3]
  %v122 = vld [vmem:[%s7] sm:$0x3]
  %124 = vset.pattern.permute.xlu0 0
  %125 = vperm.xlu0 %124, %v122
  %v126 = vpop.permute.xlu0 %125
  %v129 = vsel %vm96, %v121, 0
  %131 = vmatpush.msra.mxu0 0.0
  %132 = vmatpush.msra.mxu0 0.0
  %133 = vmatpush.msra.mxu0 0.0
  %134 = vmatpush.msra.mxu0 0.0
  %135 = vmatpush.msra.mxu0 0.0
  %136 = vmatpush.msra.mxu0 0.0
  %137 = vmatpush.msra.mxu0 0.0
  %138 = vmatpush.msra.mxu0 0.0
  %139 = vmatpush.msra.mxu0 0.0
  %140 = vmatpush.msra.mxu0 0.0
  %141 = vmatpush.msra.mxu0 0.0
  %142 = vmatpush.msra.mxu0 0.0
  %143 = vmatpush.msra.mxu0 0.0
  %144 = vmatpush.msra.mxu0 0.0
  %145 = vmatpush.msra.mxu0 0.0
  %146 = vmatpush.msra.mxu0 %v33
  %147 = vmatmul.f32.gmra.mxu0 %v129
  %v148 = vpop.f32.mrf.mxu0
  %v149 = vadd.f32 %v126, %v148
  %150 = vdwg.mxu0
  %p151 = scmp.lt.f32.partialorder %s120, 1.0
  %v152 = vstv %s120
  %v153 = vmul.f32 %v152, %v118
  %s154 = ssub.f32 1.0, %s120
  %v155 = vstv %s154
  %v156 = vmul.f32 %v155, %v149
  %v157 = vadd.f32 %v153, %v156
  %s158 = scalar_select %p151, 1, 0
  %v159 = vstv %s158
  %vm160 = vcmp.eq.s32.totalorder %v159, 1
  %v161 = vsel %vm160, %v157, %v118
  %162 = vst [vmem:[%s9] sm:$0x3] %v161
  // Predicated region
  $region38: #{progressive_generator_forward.3} parent=0 // pred_check
    _
  $region39: #{progressive_generator_forward.3} parent=0 // pred_check_branch
    %164 = sbr.rel (0) target = $region41
  $region40: #{progressive_generator_forward.3} parent=0 // pred_region
    _
  $region41: #{progressive_generator_forward.3} parent=0 // pred_fallthru
    _
  // Predicated region
  $region42: #{progressive_generator_forward.3} parent=0 // pred_check
    _
  $region43: #{progressive_generator_forward.3} parent=0 // pred_check_branch
    %166 = sbr.rel (0) target = $region45
  $region44: #{progressive_generator_forward.3} parent=0 // pred_region
    _
  $region45: #{progressive_generator_forward.3} parent=0 // pred_fallthru
    _

// kernel: progressive_generator_forward.2
$region0: #{progressive_generator_forward.2}
  #allocation0 [shape = 'u32[]', space=smem, size = 0x4, offset = 0x4, fixed_abs, tag = 'smem constant byte address 0x4 - core index']
  #allocation1 [shape = 'u32[72,128]{1,0:T(1,128)}', space=vmem, size = 0x9000, scoped, tag = 'internal scratch']
  %s0 = inlined_call_operand.vmem [shape: f32[1,8,64], index: 0, kind: input, shape index: {}]
  %s1 = inlined_call_operand.vmem [shape: f32[1,1,8,2], index: 1, kind: input, shape index: {}]
  %s2 = inlined_call_operand.vmem [shape: f32[8,24], index: 2, kind: input, shape index: {}]
  %s3 = inlined_call_operand.vmem [shape: f32[8,1], index: 3, kind: input, shape index: {}]
  %s4 = inlined_call_operand.vmem [shape: f32[1,8,64], index: 4, kind: output, shape index: {}]
  %s5 = sld [smem:[#allocation0]]
  $region26: #{progressive_generator_forward.2} parent=0
    _
  %s7 = ssub.s32 1, %s5
  %s8 = scalar_select 0, %s7, %s5
  // Predicated region
  $region2: #{progressive_generator_forward.2} parent=0 // pred_check
    _
  $region3: #{progressive_generator_forward.2} parent=0 // pred_check_branch
    %10 = sbr.rel (0) target = $region5
  $region4: #{progressive_generator_forward.2} parent=0 // pred_region
    _
  $region5: #{progressive_generator_forward.2} parent=0 // pred_fallthru
    _
  // Predicated region
  $region6: #{progressive_generator_forward.2} parent=0 // pred_check
    _
  $region7: #{progressive_generator_forward.2} parent=0 // pred_check_branch
    %12 = sbr.rel (0) target = $region9
  $region8: #{progressive_generator_forward.2} parent=0 // pred_region
    _
  $region9: #{progressive_generator_forward.2} parent=0 // pred_fallthru
    _
  // Predicated region
  $region10: #{progressive_generator_forward.2} parent=0 // pred_check
    _
  $region11: #{progressive_generator_forward.2} parent=0 // pred_check_branch
    %14 = sbr.rel (0) target = $region13
  $region12: #{progressive_generator_forward.2} parent=0 // pred_region
    _
  $region13: #{progressive_generator_forward.2} parent=0 // pred_fallthru
    _
  // Predicated region
  $region14: #{progressive_generator_forward.2} parent=0 // pred_check
    _
  $region15: #{progressive_generator_forward.2} parent=0 // pred_check_branch
    %16 = sbr.rel (0) target = $region17
  $region16: #{progressive_generator_forward.2} parent=0 // pred_region
    _
  $region17: #{progressive_generator_forward.2} parent=0 // pred_fallthru
    _
  %v17 = vld [vmem:[%s0] sm:$0xff]
  %v18 = vld [vmem:[%s1] sm:$0xff]
  %v19 = vlaneseq
  %v20 = vand.u32 %v19, 127
  %v21 = vand.u32 %v20, 31
  %vm22 = vcmp.eq.s32.totalorder %v21, 0
  %vm23 = vcmask 1048064
  %24 = vrot.lane.b32.xlu0 %v17, 64
  %v25 = vpop.permute.xlu0 %24
  %v26 = vsel %vm23, %v25, %v17
  %27 = vrot.lane.b32.xlu0 %v26, 64
  %v28 = vpop.permute.xlu0 %27
  %v29 = vsel %vm23, %v28, %v17
  %31 = vset.pattern.permute.xlu0 0
  %32 = vperm.xlu0 %31, %v18
  %v33 = vpop.permute.xlu0 %32
  %36 = vrot.lane.b32.xlu0 %v29, 65
  %v37 = vpop.permute.xlu0 %36
  %v39 = vsel %vm22, %v33, %v37
  %vm40 = vcmp.eq.s32.totalorder %v21, 31
  %41 = vset.pattern.permute.xlu0 1
  %42 = vperm.xlu0 %41, %v18
  %v43 = vpop.permute.xlu0 %42
  %45 = vrot.lane.b32.xlu0 %v29, 127
  %v46 = vpop.permute.xlu0 %45
  %v48 = vsel %vm40, %v43, %v46
  %v49 = vld [vmem:[%s2] sm:$0xff]
  %v50 = vld [vmem:[%s3] sm:$0xff]
  %52 = vset.pattern.permute.xlu0 0
  %53 = vperm.xlu0 %52, %v50
  %v54 = vpop.permute.xlu0 %53
  %vm56 = vcmask 195584
  %v58 = vsel %vm56, %v49, 0
  %60 = vmatpush.msra.mxu0 0.0
  %61 = vmatpush.msra.mxu0 0.0
  %62 = vmatpush.msra.mxu0 0.0
  %63 = vmatpush.msra.mxu0 0.0
  %64 = vmatpush.msra.mxu0 0.0
  %65 = vmatpush.msra.mxu0 0.0
  %66 = vmatpush.msra.mxu0 0.0
  %67 = vmatpush.msra.mxu0 0.0
  %68 = vmatpush.msra.mxu0 0.0
  %69 = vmatpush.msra.mxu0 0.0
  %70 = vmatpush.msra.mxu0 0.0
  %71 = vmatpush.msra.mxu0 0.0
  %72 = vmatpush.msra.mxu0 0.0
  %73 = vmatpush.msra.mxu0 %v48
  %74 = vmatpush.msra.mxu0 %v39
  %75 = vmatpush.msra.mxu0 %v17
  %76 = vmatmul.f32.gmra.mxu0 %v58
  %v77 = vpop.f32.mrf.mxu0
  %v78 = vadd.f32 %v54, %v77
  %79 = vdwg.mxu0
  %vm80 = vcmp.ge.f32.partialorder %v78, 0.0
  %v81 = vmul.f32 %v78, 0.2
  %v82 = vsel %vm80, %v78, %v81
  %vm83 = vcmask 523264
  %84 = vst.msk [vmem:[%s4] sm:$0xff] %vm83, %v82
  // Predicated region
  $region18: #{progressive_generator_forward.2} parent=0 // pred_check
    _
  $region19: #{progressive_generator_forward.2} parent=0 // pred_check_branch
    %86 = sbr.rel (0) target = $region21
  $region20: #{progressive_generator_forward.2} parent=0 // pred_region
    _
  $region21: #{progressive_generator_forward.2} parent=0 // pred_fallthru
    _
  // Predicated region
  $region22: #{progressive_generator_forward.2} parent=0 // pred_check
    _
  $region23: #{progressive_generator_forward.2} parent=0 // pred_check_branch
    %88 = sbr.rel (0) target = $region25
  $region24: #{progressive_generator_forward.2} parent=0 // pred_region
    _
  $region25: #{progressive_generator_forward.2} parent=0 // pred_fallthru
    _

</llo_original>
